<compile_context>
chip_gen: v7x
topology: tpu7x:2x2x1
jax: 0.10.0
libtpu: 0.0.40
codegen_flags: <defaults>
</compile_context>

<pallas_src>
import functools

import numpy as np
import jax
import jax.numpy as jnp
from jax import lax
from jax.experimental import pallas as pl
from jax.experimental.pallas import tpu as pltpu  # noqa: F401  (TPU backend)


# --------------------------------------------------------------------------
# getP replicated exactly in numpy (including the sqrt(H) used for Dv in the
# original code).  Runs at trace time -> compile-time constant.
# --------------------------------------------------------------------------
def get_p_np(H, W, k):
    k = list(k)
    if k[1] == -1:
        k[1] = H
    if k[3] == -1:
        k[3] = W
    ind = np.array([2 * x + 1 for x in range(H)], dtype=np.float64)
    Dht = np.stack(
        [np.sqrt(2) / np.sqrt(H) * np.cos(u * ind * np.pi / (2 * H)) for u in range(H)]
    ).astype(np.float32)
    Dht[0, :] = 1.0 / np.sqrt(H)
    Dh = np.ascontiguousarray(Dht.T)[:, k[0]:k[1]]          # (H, kh)

    ind = np.array([2 * x + 1 for x in range(W)], dtype=np.float64)
    # NOTE: original code uses sqrt(H) here (not sqrt(W)); replicated faithfully.
    Dvt = np.stack(
        [np.sqrt(2) / np.sqrt(H) * np.cos(u * ind * np.pi / (2 * W)) for u in range(W)]
    ).astype(np.float32)
    Dvt[0, :] = 1.0 / np.sqrt(W)
    Dv = np.ascontiguousarray(Dvt.T)[:, k[2]:k[3]]           # (W, kw)

    # P[h*W+w, a*kw+b] = Dh[h, a] * Dv[w, b]  (identical to the EH-matmul build)
    P = (Dh[:, None, :, None] * Dv[None, :, None, :]).reshape(H * W, -1)
    return P.astype(np.float32)                              # (HW, N)


# --------------------------------------------------------------------------
# Pallas kernel: entire batch in one invocation (no grid).
# --------------------------------------------------------------------------
def fsa_kernel(x_ref, p_ref, pts_ref, wqkv_ref, bqkv_ref, wo_ref, bo_ref, o_ref,
               *, batch, ci):
    x = x_ref[...]                                           # (B*C, HW)
    P = p_ref[...]                                           # (HW, N)
    PTs = pts_ref[...]                                       # (N, HW)  = P^T / HW

    # Frequency projection for the whole batch: (B*C, HW) @ (HW, N)
    xP = jnp.dot(x, P, preferred_element_type=jnp.float32)               # (B*C, N)

    # Fused theta/phi/g 1x1 convs via block-diagonal weight:
    # (B*3Ci, B*C) @ (B*C, N) + (B*3Ci, 1)
    qkv = (jnp.dot(wqkv_ref[...], xP, preferred_element_type=jnp.float32)
           + bqkv_ref[...])                                               # (B*3Ci, N)

    # Per-batch attention (B tiny & static -> unrolled).
    tmps = []
    for b in range(batch):
        base = b * 3 * ci
        q = qkv[base:base + ci]                              # (Ci, N)
        k = qkv[base + ci:base + 2 * ci]                     # (Ci, N)
        v = qkv[base + 2 * ci:base + 3 * ci]                 # (Ci, N)
        # fatt = k^T @ q  (1/(H*W) is pre-folded into PTs); contract dim 0.
        fatt = lax.dot_general(
            k, q, (((0,), (0,)), ((), ())),
            preferred_element_type=jnp.float32)                           # (N, N)
        tmps.append(jnp.dot(v, fatt, preferred_element_type=jnp.float32))  # (Ci, N)
    tmp_all = jnp.concatenate(tmps, axis=0)                  # (B*Ci, N)

    # Back to spatial domain (scale already folded into PTs): (B*Ci, N) @ (N, HW)
    out_sp = jnp.dot(tmp_all, PTs, preferred_element_type=jnp.float32)    # (B*Ci, HW)

    # conv_out (block-diag over batch) + residual.
    out = (jnp.dot(wo_ref[...], out_sp, preferred_element_type=jnp.float32)
           + bo_ref[...])                                                 # (B*C, HW)
    o_ref[...] = x + out


# --------------------------------------------------------------------------
# Host wrapper (jit-compiled: weight fusion + pallas_call = one executable).
# --------------------------------------------------------------------------
@functools.partial(jax.jit, static_argnames=("k_cfg",))
def fre_nonlocal_pallas(x, Wq, bq, Wk, bk, Wg, bg, Wo, bo, *, k_cfg):
    B, C, H, W = x.shape
    HW = H * W
    Ci = Wq.shape[0]

    # Host (numpy, trace-time) constants: P and P^T with 1/(H*W) folded in.
    P_np = get_p_np(H, W, k_cfg)                             # (HW, N)
    N = P_np.shape[1]
    P = jnp.asarray(P_np)
    PTs = jnp.asarray(np.ascontiguousarray(P_np.T) / np.float32(HW))  # (N, HW)

    # Host-side weight fusion (layout plumbing, fused into this jit):
    eyeB = jnp.eye(B, dtype=jnp.float32)
    Wqkv = jnp.concatenate([Wq, Wk, Wg], axis=0)             # (3Ci, C)
    bqkv = jnp.concatenate([bq, bk, bg], axis=0)             # (3Ci, 1)
    Wqkv_blk = jnp.kron(eyeB, Wqkv)                          # (B*3Ci, B*C)
    bqkv_all = jnp.tile(bqkv, (B, 1))                        # (B*3Ci, 1)
    Wo_blk = jnp.kron(eyeB, Wo)                              # (B*C, B*Ci)
    bo_all = jnp.tile(bo, (B, 1))                            # (B*C, 1)

    x2 = x.reshape(B * C, HW)                                # densest 2-D packing

    flops = int(2 * (B * C * HW * N + B * 3 * Ci * B * C * N
                     + 2 * B * Ci * N * N
                     + B * Ci * N * HW + B * C * B * Ci * HW) + B * C * HW)
    bytes_accessed = int(4 * (2 * B * C * HW + P.size + PTs.size + Wqkv_blk.size
                              + bqkv_all.size + Wo_blk.size + bo_all.size))

    out2 = pl.pallas_call(
        functools.partial(fsa_kernel, batch=B, ci=Ci),
        out_shape=jax.ShapeDtypeStruct((B * C, HW), jnp.float32),
        input_output_aliases={0: 0},                         # residual reuses x buffer
        cost_estimate=pl.CostEstimate(flops=flops, transcendentals=0,
                                      bytes_accessed=bytes_accessed),
    )(x2, P, PTs, Wqkv_blk, bqkv_all, Wo_blk, bo_all)

    return out2.reshape(B, C, H, W)


# --------------------------------------------------------------------------
# Pure-JAX reference (unfused parameters, literal transcription) for checking.
# --------------------------------------------------------------------------
def fre_nonlocal_ref(x, P, Wq, bq, Wk, bk, Wg, bg, Wo, bo):
    B, C, H, W = x.shape
    HW = H * W
    xf = x.reshape(B, C, HW)
    xP = jnp.einsum("bcs,sn->bcn", xf, P)
    q = jnp.einsum("ic,bcn->bin", Wq, xP) + bq[None]
    k = jnp.einsum("ic,bcn->bin", Wk, xP) + bk[None]
    v = jnp.einsum("ic,bcn->bin", Wg, xP) + bg[None]
    fatt = jnp.einsum("bim,bin->bmn", k, q) / HW
    tmp = jnp.einsum("bin,bnm->bim", v, fatt)
    out_sp = jnp.einsum("bin,sn->bis", tmp, P)
    out = jnp.einsum("ci,bis->bcs", Wo, out_sp) + bo[None]
    return (xf + out).reshape(B, C, H, W)


if __name__ == "__main__":
    B, C, H, W = 2, 4, 8, 8
    reduction = 2
    Ci = max(C // reduction, 1)
    k_cfg = (0, 4, 0, 4)

    key = jax.random.PRNGKey(0)
    keys = jax.random.split(key, 10)
    x = jax.random.normal(keys[0], (B, C, H, W), dtype=jnp.float32)

    # Deterministic synthetic parameters (the module's zeros-init for conv_out
    # would make the block a no-op; use small random values to exercise the math).
    std = 0.01
    Wq = std * jax.random.normal(keys[1], (Ci, C), dtype=jnp.float32)
    bq = std * jax.random.normal(keys[2], (Ci, 1), dtype=jnp.float32)
    Wk = std * jax.random.normal(keys[3], (Ci, C), dtype=jnp.float32)
    bk = std * jax.random.normal(keys[4], (Ci, 1), dtype=jnp.float32)
    Wg = std * jax.random.normal(keys[5], (Ci, C), dtype=jnp.float32)
    bg = std * jax.random.normal(keys[6], (Ci, 1), dtype=jnp.float32)
    Wo = std * jax.random.normal(keys[7], (C, Ci), dtype=jnp.float32)
    bo = std * jax.random.normal(keys[8], (C, 1), dtype=jnp.float32)

    out = fre_nonlocal_pallas(x, Wq, bq, Wk, bk, Wg, bg, Wo, bo, k_cfg=k_cfg)
    out = jax.block_until_ready(out)

    P = jnp.asarray(get_p_np(H, W, k_cfg))
    ref = fre_nonlocal_ref(x, P, Wq, bq, Wk, bk, Wg, bg, Wo, bo)
    np.testing.assert_allclose(np.asarray(out), np.asarray(ref), rtol=1e-5, atol=1e-5)

    # TODO(synk): the 'embedded_gaussian' (normalized) mode branch is not
    # implemented; the module default mode='dot_product' is what is reproduced.
    print("KERNEL_OK")
</pallas_src>

<mosaic_0001>
module attributes {stable_mosaic.version = 11 : i64} {
  func.func @fsa_kernel(%arg0: memref<8x64xf32, #tpu.memory_space<vmem>>, %arg1: memref<64x16xf32, #tpu.memory_space<vmem>>, %arg2: memref<16x64xf32, #tpu.memory_space<vmem>>, %arg3: memref<12x8xf32, #tpu.memory_space<vmem>>, %arg4: memref<12x1xf32, #tpu.memory_space<vmem>>, %arg5: memref<8x4xf32, #tpu.memory_space<vmem>>, %arg6: memref<8x1xf32, #tpu.memory_space<vmem>>, %arg7: memref<8x64xf32, #tpu.memory_space<vmem>>) attributes {dimension_semantics = [], scalar_prefetch = 0 : i64, scratch_operands = 0 : i64, tpu.core_type = #tpu.core_type<tc>} {
    %c0 = arith.constant 0 : index
    %c0_0 = arith.constant 0 : index
    %0 = vector.load %arg0[%c0, %c0_0] : memref<8x64xf32, #tpu.memory_space<vmem>>, vector<8x64xf32>
    %c0_1 = arith.constant 0 : index
    %c0_2 = arith.constant 0 : index
    %1 = vector.load %arg1[%c0_1, %c0_2] : memref<64x16xf32, #tpu.memory_space<vmem>>, vector<64x16xf32>
    %c0_3 = arith.constant 0 : index
    %c0_4 = arith.constant 0 : index
    %2 = vector.load %arg2[%c0_3, %c0_4] : memref<16x64xf32, #tpu.memory_space<vmem>>, vector<16x64xf32>
    %cst = arith.constant dense<0.000000e+00> : vector<8x16xf32>
    %3 = tpu.matmul %0, %1, %cst {dimension_numbers = #tpu.dot_dimension_numbers<[1], [0], [0], [1], [0, 0, 1, 1], [], []>} : vector<8x64xf32>, vector<64x16xf32>, vector<8x16xf32> -> vector<8x16xf32>
    %c0_5 = arith.constant 0 : index
    %c0_6 = arith.constant 0 : index
    %4 = vector.load %arg3[%c0_5, %c0_6] : memref<12x8xf32, #tpu.memory_space<vmem>>, vector<12x8xf32>
    %cst_7 = arith.constant dense<0.000000e+00> : vector<12x16xf32>
    %5 = tpu.matmul %4, %3, %cst_7 {dimension_numbers = #tpu.dot_dimension_numbers<[1], [0], [0], [1], [0, 0, 1, 1], [], []>} : vector<12x8xf32>, vector<8x16xf32>, vector<12x16xf32> -> vector<12x16xf32>
    %c0_8 = arith.constant 0 : index
    %c0_9 = arith.constant 0 : index
    %6 = vector.load %arg4[%c0_8, %c0_9] : memref<12x1xf32, #tpu.memory_space<vmem>>, vector<12x1xf32>
    %7 = vector.broadcast %6 : vector<12x1xf32> to vector<12x16xf32>
    %8 = arith.addf %5, %7 : vector<12x16xf32>
    %9 = vector.extract_strided_slice %8 {offsets = [0, 0], sizes = [2, 16], strides = [1, 1]} : vector<12x16xf32> to vector<2x16xf32>
    %10 = vector.extract_strided_slice %8 {offsets = [2, 0], sizes = [2, 16], strides = [1, 1]} : vector<12x16xf32> to vector<2x16xf32>
    %11 = vector.extract_strided_slice %8 {offsets = [4, 0], sizes = [2, 16], strides = [1, 1]} : vector<12x16xf32> to vector<2x16xf32>
    %cst_10 = arith.constant dense<0.000000e+00> : vector<16x16xf32>
    %12 = tpu.matmul %10, %9, %cst_10 {dimension_numbers = #tpu.dot_dimension_numbers<[0], [0], [1], [1], [0, 1, 1, 1], [], []>} : vector<2x16xf32>, vector<2x16xf32>, vector<16x16xf32> -> vector<16x16xf32>
    %cst_11 = arith.constant dense<0.000000e+00> : vector<2x16xf32>
    %13 = tpu.matmul %11, %12, %cst_11 {dimension_numbers = #tpu.dot_dimension_numbers<[1], [0], [0], [1], [0, 0, 1, 1], [], []>} : vector<2x16xf32>, vector<16x16xf32>, vector<2x16xf32> -> vector<2x16xf32>
    %14 = vector.extract_strided_slice %8 {offsets = [6, 0], sizes = [2, 16], strides = [1, 1]} : vector<12x16xf32> to vector<2x16xf32>
    %15 = vector.extract_strided_slice %8 {offsets = [8, 0], sizes = [2, 16], strides = [1, 1]} : vector<12x16xf32> to vector<2x16xf32>
    %16 = vector.extract_strided_slice %8 {offsets = [10, 0], sizes = [2, 16], strides = [1, 1]} : vector<12x16xf32> to vector<2x16xf32>
    %cst_12 = arith.constant dense<0.000000e+00> : vector<16x16xf32>
    %17 = tpu.matmul %15, %14, %cst_12 {dimension_numbers = #tpu.dot_dimension_numbers<[0], [0], [1], [1], [0, 1, 1, 1], [], []>} : vector<2x16xf32>, vector<2x16xf32>, vector<16x16xf32> -> vector<16x16xf32>
    %cst_13 = arith.constant dense<0.000000e+00> : vector<2x16xf32>
    %18 = tpu.matmul %16, %17, %cst_13 {dimension_numbers = #tpu.dot_dimension_numbers<[1], [0], [0], [1], [0, 0, 1, 1], [], []>} : vector<2x16xf32>, vector<16x16xf32>, vector<2x16xf32> -> vector<2x16xf32>
    %19 = tpu.concatenate %13, %18 in 0 : vector<2x16xf32>, vector<2x16xf32> -> vector<4x16xf32>
    %cst_14 = arith.constant dense<0.000000e+00> : vector<4x64xf32>
    %20 = tpu.matmul %19, %2, %cst_14 {dimension_numbers = #tpu.dot_dimension_numbers<[1], [0], [0], [1], [0, 0, 1, 1], [], []>} : vector<4x16xf32>, vector<16x64xf32>, vector<4x64xf32> -> vector<4x64xf32>
    %c0_15 = arith.constant 0 : index
    %c0_16 = arith.constant 0 : index
    %21 = vector.load %arg5[%c0_15, %c0_16] : memref<8x4xf32, #tpu.memory_space<vmem>>, vector<8x4xf32>
    %cst_17 = arith.constant dense<0.000000e+00> : vector<8x64xf32>
    %22 = tpu.matmul %21, %20, %cst_17 {dimension_numbers = #tpu.dot_dimension_numbers<[1], [0], [0], [1], [0, 0, 1, 1], [], []>} : vector<8x4xf32>, vector<4x64xf32>, vector<8x64xf32> -> vector<8x64xf32>
    %c0_18 = arith.constant 0 : index
    %c0_19 = arith.constant 0 : index
    %23 = vector.load %arg6[%c0_18, %c0_19] : memref<8x1xf32, #tpu.memory_space<vmem>>, vector<8x1xf32>
    %24 = vector.broadcast %23 : vector<8x1xf32> to vector<8x64xf32>
    %25 = arith.addf %22, %24 : vector<8x64xf32>
    %26 = arith.addf %0, %25 : vector<8x64xf32>
    %c0_20 = arith.constant 0 : index
    %c0_21 = arith.constant 0 : index
    %27 = vector.load %arg7[%c0_20, %c0_21] : memref<8x64xf32, #tpu.memory_space<vmem>>, vector<8x64xf32>
    tpu.vector_store %arg7[%c0_20, %c0_21], %26 {strides = array<i32>} : memref<8x64xf32, #tpu.memory_space<vmem>>, vector<8x64xf32>,
    return
  }
}

</mosaic_0001>

<llo_original>
// kernel: fre_nonlocal_pallas.1
$region0: #{fre_nonlocal_pallas.1}
  #allocation0 [shape = 'u32[]', space=smem, size = 0x4, offset = 0x4, fixed_abs, tag = 'smem constant byte address 0x4 - core index']
  #allocation1 [shape = 'u32[144,128]{1,0:T(1,128)}', space=vmem, size = 0x12000, scoped, tag = 'internal scratch']
  %s0 = inlined_call_operand.vmem [shape: f32[8,64], index: 0, kind: input, shape index: {}, may-alias: {0,7}]
  %s1 = inlined_call_operand.vmem [shape: f32[64,16], index: 1, kind: input, shape index: {}]
  %s2 = inlined_call_operand.vmem [shape: f32[16,64], index: 2, kind: input, shape index: {}]
  %s3 = inlined_call_operand.vmem [shape: f32[12,8], index: 3, kind: input, shape index: {}]
  %s4 = inlined_call_operand.vmem [shape: f32[12,1], index: 4, kind: input, shape index: {}]
  %s5 = inlined_call_operand.vmem [shape: f32[8,4], index: 5, kind: input, shape index: {}]
  %s6 = inlined_call_operand.vmem [shape: f32[8,1], index: 6, kind: input, shape index: {}]
  %s7 = inlined_call_operand.vmem [shape: f32[8,64], index: 7, kind: output, shape index: {}, may-alias: {0,7}]
  %s8 = sld [smem:[#allocation0]]
  $region38: #{fre_nonlocal_pallas.1} parent=0
    _
  %s10 = ssub.s32 1, %s8
  %s11 = scalar_select 0, %s10, %s8
  // Predicated region
  $region2: #{fre_nonlocal_pallas.1} parent=0 // pred_check
    _
  $region3: #{fre_nonlocal_pallas.1} parent=0 // pred_check_branch
    %13 = sbr.rel (0) target = $region5
  $region4: #{fre_nonlocal_pallas.1} parent=0 // pred_region
    _
  $region5: #{fre_nonlocal_pallas.1} parent=0 // pred_fallthru
    _
  // Predicated region
  $region6: #{fre_nonlocal_pallas.1} parent=0 // pred_check
    _
  $region7: #{fre_nonlocal_pallas.1} parent=0 // pred_check_branch
    %15 = sbr.rel (0) target = $region9
  $region8: #{fre_nonlocal_pallas.1} parent=0 // pred_region
    _
  $region9: #{fre_nonlocal_pallas.1} parent=0 // pred_fallthru
    _
  // Predicated region
  $region10: #{fre_nonlocal_pallas.1} parent=0 // pred_check
    _
  $region11: #{fre_nonlocal_pallas.1} parent=0 // pred_check_branch
    %17 = sbr.rel (0) target = $region13
  $region12: #{fre_nonlocal_pallas.1} parent=0 // pred_region
    _
  $region13: #{fre_nonlocal_pallas.1} parent=0 // pred_fallthru
    _
  // Predicated region
  $region14: #{fre_nonlocal_pallas.1} parent=0 // pred_check
    _
  $region15: #{fre_nonlocal_pallas.1} parent=0 // pred_check_branch
    %19 = sbr.rel (0) target = $region17
  $region16: #{fre_nonlocal_pallas.1} parent=0 // pred_region
    _
  $region17: #{fre_nonlocal_pallas.1} parent=0 // pred_fallthru
    _
  // Predicated region
  $region18: #{fre_nonlocal_pallas.1} parent=0 // pred_check
    _
  $region19: #{fre_nonlocal_pallas.1} parent=0 // pred_check_branch
    %21 = sbr.rel (0) target = $region21
  $region20: #{fre_nonlocal_pallas.1} parent=0 // pred_region
    _
  $region21: #{fre_nonlocal_pallas.1} parent=0 // pred_fallthru
    _
  // Predicated region
  $region22: #{fre_nonlocal_pallas.1} parent=0 // pred_check
    _
  $region23: #{fre_nonlocal_pallas.1} parent=0 // pred_check_branch
    %23 = sbr.rel (0) target = $region25
  $region24: #{fre_nonlocal_pallas.1} parent=0 // pred_region
    _
  $region25: #{fre_nonlocal_pallas.1} parent=0 // pred_fallthru
    _
  // Predicated region
  $region26: #{fre_nonlocal_pallas.1} parent=0 // pred_check
    _
  $region27: #{fre_nonlocal_pallas.1} parent=0 // pred_check_branch
    %25 = sbr.rel (0) target = $region29
  $region28: #{fre_nonlocal_pallas.1} parent=0 // pred_region
    _
  $region29: #{fre_nonlocal_pallas.1} parent=0 // pred_fallthru
    _
  %v26 = vld [vmem:[%s0] sm:$0xff]
  %v27 = vld [vmem:[%s1] sm:$0xff]
  %v28 = vld [vmem:[%s1 + $0x8] sm:$0xff]
  %v29 = vld [vmem:[%s1 + $0x10] sm:$0xff]
  %v30 = vld [vmem:[%s1 + $0x18] sm:$0xff]
  %v31 = vld [vmem:[%s1 + $0x20] sm:$0xff]
  %v32 = vld [vmem:[%s1 + $0x28] sm:$0xff]
  %v33 = vld [vmem:[%s1 + $0x30] sm:$0xff]
  %v34 = vld [vmem:[%s1 + $0x38] sm:$0xff]
  %v35 = vld [vmem:[%s2] sm:$0xff]
  %v36 = vld [vmem:[%s2 + $0x8] sm:$0xff]
  %vm37 = vcmask 523264
  %v39 = vsel %vm37, %v26, 0
  %41 = vmatprep.subr.mxu0 0.0
  %42 = vmatpush1.msra.mxu0 %v27
  %43 = vmatprep.subr.mxu0 0.0
  %44 = vmatpush1.msra.mxu0 %v28
  %45 = vmatprep.subr.mxu0 0.0
  %46 = vmatpush1.msra.mxu0 %v29
  %47 = vmatprep.subr.mxu0 0.0
  %48 = vmatpush1.msra.mxu0 %v30
  %49 = vmatprep.subr.mxu0 0.0
  %50 = vmatpush1.msra.mxu0 %v31
  %51 = vmatprep.subr.mxu0 0.0
  %52 = vmatpush1.msra.mxu0 %v32
  %53 = vmatprep.subr.mxu0 0.0
  %54 = vmatpush1.msra.mxu0 %v33
  %55 = vmatprep.subr.mxu0 0.0
  %56 = vmatpush1.msra.mxu0 %v34
  %57 = vmatprep.subr.mxu0 0.0
  %58 = vmatpush1.msra.mxu0 0.0
  %59 = vmatprep.subr.mxu0 0.0
  %60 = vmatpush1.msra.mxu0 0.0
  %61 = vmatprep.subr.mxu0 0.0
  %62 = vmatpush1.msra.mxu0 0.0
  %63 = vmatprep.subr.mxu0 0.0
  %64 = vmatpush1.msra.mxu0 0.0
  %65 = vmatprep.subr.mxu0 0.0
  %66 = vmatpush1.msra.mxu0 0.0
  %67 = vmatprep.subr.mxu0 0.0
  %68 = vmatpush1.msra.mxu0 0.0
  %69 = vmatprep.subr.mxu0 0.0
  %70 = vmatpush1.msra.mxu0 0.0
  %71 = vmatprep.subr.mxu0 0.0
  %72 = vmatpush1.msra.mxu0 0.0
  %73 = vmatprep.subr.mxu0 0.0
  %74 = vmatpush1.msra.mxu0 0.0
  %75 = vmatprep.subr.mxu0 0.0
  %76 = vmatpush1.msra.mxu0 0.0
  %77 = vmatprep.subr.mxu0 0.0
  %78 = vmatpush1.msra.mxu0 0.0
  %79 = vmatprep.subr.mxu0 0.0
  %80 = vmatpush1.msra.mxu0 0.0
  %81 = vmatprep.subr.mxu0 0.0
  %82 = vmatpush1.msra.mxu0 0.0
  %83 = vmatprep.subr.mxu0 0.0
  %84 = vmatpush1.msra.mxu0 0.0
  %85 = vmatprep.subr.mxu0 0.0
  %86 = vmatpush1.msra.mxu0 0.0
  %87 = vmatprep.subr.mxu0 0.0
  %88 = vmatpush1.msra.mxu0 0.0
  %89 = vmatprep.subr.mxu0 0.0
  %90 = vmatpush1.msra.mxu0 0.0
  %91 = vmatprep.subr.mxu0 0.0
  %92 = vmatpush1.msra.mxu0 0.0
  %93 = vmatprep.subr.mxu0 0.0
  %94 = vmatpush1.msra.mxu0 0.0
  %95 = vmatprep.subr.mxu0 0.0
  %96 = vmatpush1.msra.mxu0 0.0
  %97 = vmatprep.subr.mxu0 0.0
  %98 = vmatpush1.msra.mxu0 0.0
  %99 = vmatprep.subr.mxu0 0.0
  %100 = vmatpush1.msra.mxu0 0.0
  %101 = vmatprep.subr.mxu0 0.0
  %102 = vmatpush1.msra.mxu0 0.0
  %103 = vmatprep.subr.mxu0 0.0
  %104 = vmatpush1.msra.mxu0 0.0
  %105 = vmatprep.mubr.f32.mxu0 0.0
  %106 = vmatmul.mubr.f32.gmra.mrb[0].mxu0 %v39
  %v107 = vpop.f32.mrb[0].mxu0
  %v108 = vadd.f32 0.0, %v107
  %v109 = vpop.f32.mrb[0].mxu0
  %110 = vdwg.mxu0
  %v111 = vld [vmem:[%s3] sm:$0xff]
  %v112 = vld [vmem:[%s3 + $0x8] sm:$0xf]
  %v113 = vld [vmem:[%s4] sm:$0xff]
  %v114 = vld [vmem:[%s4 + $0x8] sm:$0xf]
  %116 = vset.pattern.permute.xlu0 0
  %117 = vperm.xlu0 %116, %v113
  %v118 = vpop.permute.xlu0 %117
  %121 = vset.pattern.permute.xlu0 0
  %122 = vperm.xlu0 %121, %v114
  %v123 = vpop.permute.xlu0 %122
  %vm125 = vcmask 64512
  %v127 = vsel %vm125, %v111, 0
  %v130 = vsel %vm125, %v112, 0
  %132 = vmatprep.subr.mxu0 0.0
  %133 = vmatpush1.msra.mxu0 %v108
  %134 = vmatprep.subr.mxu0 0.0
  %135 = vmatpush1.msra.mxu0 0.0
  %136 = vmatprep.subr.mxu0 0.0
  %137 = vmatpush1.msra.mxu0 0.0
  %138 = vmatprep.subr.mxu0 0.0
  %139 = vmatpush1.msra.mxu0 0.0
  %140 = vmatprep.subr.mxu0 0.0
  %141 = vmatpush1.msra.mxu0 0.0
  %142 = vmatprep.subr.mxu0 0.0
  %143 = vmatpush1.msra.mxu0 0.0
  %144 = vmatprep.subr.mxu0 0.0
  %145 = vmatpush1.msra.mxu0 0.0
  %146 = vmatprep.subr.mxu0 0.0
  %147 = vmatpush1.msra.mxu0 0.0
  %148 = vmatprep.subr.mxu0 0.0
  %149 = vmatpush1.msra.mxu0 0.0
  %150 = vmatprep.subr.mxu0 0.0
  %151 = vmatpush1.msra.mxu0 0.0
  %152 = vmatprep.subr.mxu0 0.0
  %153 = vmatpush1.msra.mxu0 0.0
  %154 = vmatprep.subr.mxu0 0.0
  %155 = vmatpush1.msra.mxu0 0.0
  %156 = vmatprep.subr.mxu0 0.0
  %157 = vmatpush1.msra.mxu0 0.0
  %158 = vmatprep.subr.mxu0 0.0
  %159 = vmatpush1.msra.mxu0 0.0
  %160 = vmatprep.subr.mxu0 0.0
  %161 = vmatpush1.msra.mxu0 0.0
  %162 = vmatprep.subr.mxu0 0.0
  %163 = vmatpush1.msra.mxu0 0.0
  %164 = vmatprep.subr.mxu0 0.0
  %165 = vmatpush1.msra.mxu0 0.0
  %166 = vmatprep.subr.mxu0 0.0
  %167 = vmatpush1.msra.mxu0 0.0
  %168 = vmatprep.subr.mxu0 0.0
  %169 = vmatpush1.msra.mxu0 0.0
  %170 = vmatprep.subr.mxu0 0.0
  %171 = vmatpush1.msra.mxu0 0.0
  %172 = vmatprep.subr.mxu0 0.0
  %173 = vmatpush1.msra.mxu0 0.0
  %174 = vmatprep.subr.mxu0 0.0
  %175 = vmatpush1.msra.mxu0 0.0
  %176 = vmatprep.subr.mxu0 0.0
  %177 = vmatpush1.msra.mxu0 0.0
  %178 = vmatprep.subr.mxu0 0.0
  %179 = vmatpush1.msra.mxu0 0.0
  %180 = vmatprep.subr.mxu0 0.0
  %181 = vmatpush1.msra.mxu0 0.0
  %182 = vmatprep.subr.mxu0 0.0
  %183 = vmatpush1.msra.mxu0 0.0
  %184 = vmatprep.subr.mxu0 0.0
  %185 = vmatpush1.msra.mxu0 0.0
  %186 = vmatprep.subr.mxu0 0.0
  %187 = vmatpush1.msra.mxu0 0.0
  %188 = vmatprep.subr.mxu0 0.0
  %189 = vmatpush1.msra.mxu0 0.0
  %190 = vmatprep.subr.mxu0 0.0
  %191 = vmatpush1.msra.mxu0 0.0
  %192 = vmatprep.subr.mxu0 0.0
  %193 = vmatpush1.msra.mxu0 0.0
  %194 = vmatprep.subr.mxu0 0.0
  %195 = vmatpush1.msra.mxu0 0.0
  %196 = vmatprep.mubr.f32.mxu0 0.0
  %197 = vmatmul.mubr.f32.gmra.mrb[0].mxu0 %v127
  %v198 = vpop.f32.mrb[0].mxu0
  %v199 = vadd.f32 %v118, %v198
  %v200 = vpop.f32.mrb[0].mxu0
  %201 = vmatprep.mubr.f32.mxu0 0.0
  %202 = vmatmul.mubr.f32.gmra.mrb[0].mxu0 %v130
  %v203 = vpop.f32.mrb[0].mxu0
  %v204 = vadd.f32 %v123, %v203
  %v205 = vpop.f32.mrb[0].mxu0
  %206 = vdwg.mxu0
  %v208 = vrot.slane %v199, 2
  %210 = vxpose.xlu0.b32.start [1/16] %v208, 128
  %211 = vxpose.xlu0.b32.cont [2/16] 0.0, 128
  %212 = vxpose.xlu0.b32.cont [3/16] 0.0, 128
  %213 = vxpose.xlu0.b32.cont [4/16] 0.0, 128
  %214 = vxpose.xlu0.b32.cont [5/16] 0.0, 128
  %215 = vxpose.xlu0.b32.cont [6/16] 0.0, 128
  %216 = vxpose.xlu0.b32.cont [7/16] 0.0, 128
  %217 = vxpose.xlu0.b32.cont [8/16] 0.0, 128
  %218 = vxpose.xlu0.b32.cont [9/16] 0.0, 128
  %219 = vxpose.xlu0.b32.cont [10/16] 0.0, 128
  %220 = vxpose.xlu0.b32.cont [11/16] 0.0, 128
  %221 = vxpose.xlu0.b32.cont [12/16] 0.0, 128
  %222 = vxpose.xlu0.b32.cont [13/16] 0.0, 128
  %223 = vxpose.xlu0.b32.cont [14/16] 0.0, 128
  %224 = vxpose.xlu0.b32.cont [15/16] 0.0, 128
  %225 = vxpose.xlu0.b32.end [16/16] 0.0, 128
  %v226 = vpop.trf.xlu0
  %v227 = vpop.trf.xlu0
  %v228 = vpop.trf.xlu0
  %v229 = vpop.trf.xlu0
  %v230 = vpop.trf.xlu0
  %v231 = vpop.trf.xlu0
  %v232 = vpop.trf.xlu0
  %v233 = vpop.trf.xlu0
  %v234 = vpop.trf.xlu0
  %v235 = vpop.trf.xlu0
  %v236 = vpop.trf.xlu0
  %v237 = vpop.trf.xlu0
  %v238 = vpop.trf.xlu0
  %v239 = vpop.trf.xlu0
  %v240 = vpop.trf.xlu0
  %v241 = vpop.trf.xlu0
  %vm242 = vcmask 15360
  %v244 = vsel %vm242, %v226, 0
  %v247 = vsel %vm242, %v227, 0
  %vm249 = vcmask 1041408
  %v250 = vsel %vm249, %v199, 0
  %252 = vmatprep.subr.mxu0 0.0
  %253 = vmatpush1.msra.mxu0 %v250
  %254 = vmatprep.subr.mxu0 0.0
  %255 = vmatpush1.msra.mxu0 0.0
  %256 = vmatprep.subr.mxu0 0.0
  %257 = vmatpush1.msra.mxu0 0.0
  %258 = vmatprep.subr.mxu0 0.0
  %259 = vmatpush1.msra.mxu0 0.0
  %260 = vmatprep.subr.mxu0 0.0
  %261 = vmatpush1.msra.mxu0 0.0
  %262 = vmatprep.subr.mxu0 0.0
  %263 = vmatpush1.msra.mxu0 0.0
  %264 = vmatprep.subr.mxu0 0.0
  %265 = vmatpush1.msra.mxu0 0.0
  %266 = vmatprep.subr.mxu0 0.0
  %267 = vmatpush1.msra.mxu0 0.0
  %268 = vmatprep.subr.mxu0 0.0
  %269 = vmatpush1.msra.mxu0 0.0
  %270 = vmatprep.subr.mxu0 0.0
  %271 = vmatpush1.msra.mxu0 0.0
  %272 = vmatprep.subr.mxu0 0.0
  %273 = vmatpush1.msra.mxu0 0.0
  %274 = vmatprep.subr.mxu0 0.0
  %275 = vmatpush1.msra.mxu0 0.0
  %276 = vmatprep.subr.mxu0 0.0
  %277 = vmatpush1.msra.mxu0 0.0
  %278 = vmatprep.subr.mxu0 0.0
  %279 = vmatpush1.msra.mxu0 0.0
  %280 = vmatprep.subr.mxu0 0.0
  %281 = vmatpush1.msra.mxu0 0.0
  %282 = vmatprep.subr.mxu0 0.0
  %283 = vmatpush1.msra.mxu0 0.0
  %284 = vmatprep.subr.mxu0 0.0
  %285 = vmatpush1.msra.mxu0 0.0
  %286 = vmatprep.subr.mxu0 0.0
  %287 = vmatpush1.msra.mxu0 0.0
  %288 = vmatprep.subr.mxu0 0.0
  %289 = vmatpush1.msra.mxu0 0.0
  %290 = vmatprep.subr.mxu0 0.0
  %291 = vmatpush1.msra.mxu0 0.0
  %292 = vmatprep.subr.mxu0 0.0
  %293 = vmatpush1.msra.mxu0 0.0
  %294 = vmatprep.subr.mxu0 0.0
  %295 = vmatpush1.msra.mxu0 0.0
  %296 = vmatprep.subr.mxu0 0.0
  %297 = vmatpush1.msra.mxu0 0.0
  %298 = vmatprep.subr.mxu0 0.0
  %299 = vmatpush1.msra.mxu0 0.0
  %300 = vmatprep.subr.mxu0 0.0
  %301 = vmatpush1.msra.mxu0 0.0
  %302 = vmatprep.subr.mxu0 0.0
  %303 = vmatpush1.msra.mxu0 0.0
  %304 = vmatprep.subr.mxu0 0.0
  %305 = vmatpush1.msra.mxu0 0.0
  %306 = vmatprep.subr.mxu0 0.0
  %307 = vmatpush1.msra.mxu0 0.0
  %308 = vmatprep.subr.mxu0 0.0
  %309 = vmatpush1.msra.mxu0 0.0
  %310 = vmatprep.subr.mxu0 0.0
  %311 = vmatpush1.msra.mxu0 0.0
  %312 = vmatprep.subr.mxu0 0.0
  %313 = vmatpush1.msra.mxu0 0.0
  %314 = vmatprep.subr.mxu0 0.0
  %315 = vmatpush1.msra.mxu0 0.0
  %316 = vmatprep.mubr.f32.mxu0 0.0
  %317 = vmatmul.mubr.f32.gmra.mrb[0].mxu0 %v244
  %v318 = vpop.f32.mrb[0].mxu0
  %v319 = vadd.f32 0.0, %v318
  %v320 = vpop.f32.mrb[0].mxu0
  %321 = vmatprep.mubr.f32.mxu0 0.0
  %322 = vmatmul.mubr.f32.gmra.mrb[0].mxu0 %v247
  %v323 = vpop.f32.mrb[0].mxu0
  %v324 = vadd.f32 0.0, %v323
  %v325 = vpop.f32.mrb[0].mxu0
  %326 = vdwg.mxu0
  %v327 = vrot.slane %v199, 4
  %vm328 = vcmask 130048
  %v329 = vsel %vm328, %v327, 0
  %331 = vmatprep.subr.mxu0 0.0
  %332 = vmatpush1.msra.mxu0 %v319
  %333 = vmatprep.subr.mxu0 0.0
  %334 = vmatpush1.msra.mxu0 %v324
  %335 = vmatprep.subr.mxu0 0.0
  %336 = vmatpush1.msra.mxu0 0.0
  %337 = vmatprep.subr.mxu0 0.0
  %338 = vmatpush1.msra.mxu0 0.0
  %339 = vmatprep.subr.mxu0 0.0
  %340 = vmatpush1.msra.mxu0 0.0
  %341 = vmatprep.subr.mxu0 0.0
  %342 = vmatpush1.msra.mxu0 0.0
  %343 = vmatprep.subr.mxu0 0.0
  %344 = vmatpush1.msra.mxu0 0.0
  %345 = vmatprep.subr.mxu0 0.0
  %346 = vmatpush1.msra.mxu0 0.0
  %347 = vmatprep.subr.mxu0 0.0
  %348 = vmatpush1.msra.mxu0 0.0
  %349 = vmatprep.subr.mxu0 0.0
  %350 = vmatpush1.msra.mxu0 0.0
  %351 = vmatprep.subr.mxu0 0.0
  %352 = vmatpush1.msra.mxu0 0.0
  %353 = vmatprep.subr.mxu0 0.0
  %354 = vmatpush1.msra.mxu0 0.0
  %355 = vmatprep.subr.mxu0 0.0
  %356 = vmatpush1.msra.mxu0 0.0
  %357 = vmatprep.subr.mxu0 0.0
  %358 = vmatpush1.msra.mxu0 0.0
  %359 = vmatprep.subr.mxu0 0.0
  %360 = vmatpush1.msra.mxu0 0.0
  %361 = vmatprep.subr.mxu0 0.0
  %362 = vmatpush1.msra.mxu0 0.0
  %363 = vmatprep.subr.mxu0 0.0
  %364 = vmatpush1.msra.mxu0 0.0
  %365 = vmatprep.subr.mxu0 0.0
  %366 = vmatpush1.msra.mxu0 0.0
  %367 = vmatprep.subr.mxu0 0.0
  %368 = vmatpush1.msra.mxu0 0.0
  %369 = vmatprep.subr.mxu0 0.0
  %370 = vmatpush1.msra.mxu0 0.0
  %371 = vmatprep.subr.mxu0 0.0
  %372 = vmatpush1.msra.mxu0 0.0
  %373 = vmatprep.subr.mxu0 0.0
  %374 = vmatpush1.msra.mxu0 0.0
  %375 = vmatprep.subr.mxu0 0.0
  %376 = vmatpush1.msra.mxu0 0.0
  %377 = vmatprep.subr.mxu0 0.0
  %378 = vmatpush1.msra.mxu0 0.0
  %379 = vmatprep.subr.mxu0 0.0
  %380 = vmatpush1.msra.mxu0 0.0
  %381 = vmatprep.subr.mxu0 0.0
  %382 = vmatpush1.msra.mxu0 0.0
  %383 = vmatprep.subr.mxu0 0.0
  %384 = vmatpush1.msra.mxu0 0.0
  %385 = vmatprep.subr.mxu0 0.0
  %386 = vmatpush1.msra.mxu0 0.0
  %387 = vmatprep.subr.mxu0 0.0
  %388 = vmatpush1.msra.mxu0 0.0
  %389 = vmatprep.subr.mxu0 0.0
  %390 = vmatpush1.msra.mxu0 0.0
  %391 = vmatprep.subr.mxu0 0.0
  %392 = vmatpush1.msra.mxu0 0.0
  %393 = vmatprep.subr.mxu0 0.0
  %394 = vmatpush1.msra.mxu0 0.0
  %395 = vmatprep.mubr.f32.mxu0 0.0
  %396 = vmatmul.mubr.f32.gmra.mrb[0].mxu0 %v329
  %v397 = vpop.f32.mrb[0].mxu0
  %v398 = vadd.f32 0.0, %v397
  %v399 = vpop.f32.mrb[0].mxu0
  %400 = vdwg.mxu0
  %401 = vxpose.xlu0.b32.start [1/16] %v204, 128
  %402 = vxpose.xlu0.b32.cont [2/16] 0.0, 128
  %403 = vxpose.xlu0.b32.cont [3/16] 0.0, 128
  %404 = vxpose.xlu0.b32.cont [4/16] 0.0, 128
  %405 = vxpose.xlu0.b32.cont [5/16] 0.0, 128
  %406 = vxpose.xlu0.b32.cont [6/16] 0.0, 128
  %407 = vxpose.xlu0.b32.cont [7/16] 0.0, 128
  %408 = vxpose.xlu0.b32.cont [8/16] 0.0, 128
  %409 = vxpose.xlu0.b32.cont [9/16] 0.0, 128
  %410 = vxpose.xlu0.b32.cont [10/16] 0.0, 128
  %411 = vxpose.xlu0.b32.cont [11/16] 0.0, 128
  %412 = vxpose.xlu0.b32.cont [12/16] 0.0, 128
  %413 = vxpose.xlu0.b32.cont [13/16] 0.0, 128
  %414 = vxpose.xlu0.b32.cont [14/16] 0.0, 128
  %415 = vxpose.xlu0.b32.cont [15/16] 0.0, 128
  %416 = vxpose.xlu0.b32.end [16/16] 0.0, 128
  %v417 = vpop.trf.xlu0
  %v418 = vpop.trf.xlu0
  %v419 = vpop.trf.xlu0
  %v420 = vpop.trf.xlu0
  %v421 = vpop.trf.xlu0
  %v422 = vpop.trf.xlu0
  %v423 = vpop.trf.xlu0
  %v424 = vpop.trf.xlu0
  %v425 = vpop.trf.xlu0
  %v426 = vpop.trf.xlu0
  %v427 = vpop.trf.xlu0
  %v428 = vpop.trf.xlu0
  %v429 = vpop.trf.xlu0
  %v430 = vpop.trf.xlu0
  %v431 = vpop.trf.xlu0
  %v432 = vpop.trf.xlu0
  %v433 = vrot.slane %v199, 6
  %v435 = vsel %vm242, %v417, 0
  %v438 = vsel %vm242, %v418, 0
  %v440 = vsel %vm249, %v433, 0
  %442 = vmatprep.subr.mxu0 0.0
  %443 = vmatpush1.msra.mxu0 %v440
  %444 = vmatprep.subr.mxu0 0.0
  %445 = vmatpush1.msra.mxu0 0.0
  %446 = vmatprep.subr.mxu0 0.0
  %447 = vmatpush1.msra.mxu0 0.0
  %448 = vmatprep.subr.mxu0 0.0
  %449 = vmatpush1.msra.mxu0 0.0
  %450 = vmatprep.subr.mxu0 0.0
  %451 = vmatpush1.msra.mxu0 0.0
  %452 = vmatprep.subr.mxu0 0.0
  %453 = vmatpush1.msra.mxu0 0.0
  %454 = vmatprep.subr.mxu0 0.0
  %455 = vmatpush1.msra.mxu0 0.0
  %456 = vmatprep.subr.mxu0 0.0
  %457 = vmatpush1.msra.mxu0 0.0
  %458 = vmatprep.subr.mxu0 0.0
  %459 = vmatpush1.msra.mxu0 0.0
  %460 = vmatprep.subr.mxu0 0.0
  %461 = vmatpush1.msra.mxu0 0.0
  %462 = vmatprep.subr.mxu0 0.0
  %463 = vmatpush1.msra.mxu0 0.0
  %464 = vmatprep.subr.mxu0 0.0
  %465 = vmatpush1.msra.mxu0 0.0
  %466 = vmatprep.subr.mxu0 0.0
  %467 = vmatpush1.msra.mxu0 0.0
  %468 = vmatprep.subr.mxu0 0.0
  %469 = vmatpush1.msra.mxu0 0.0
  %470 = vmatprep.subr.mxu0 0.0
  %471 = vmatpush1.msra.mxu0 0.0
  %472 = vmatprep.subr.mxu0 0.0
  %473 = vmatpush1.msra.mxu0 0.0
  %474 = vmatprep.subr.mxu0 0.0
  %475 = vmatpush1.msra.mxu0 0.0
  %476 = vmatprep.subr.mxu0 0.0
  %477 = vmatpush1.msra.mxu0 0.0
  %478 = vmatprep.subr.mxu0 0.0
  %479 = vmatpush1.msra.mxu0 0.0
  %480 = vmatprep.subr.mxu0 0.0
  %481 = vmatpush1.msra.mxu0 0.0
  %482 = vmatprep.subr.mxu0 0.0
  %483 = vmatpush1.msra.mxu0 0.0
  %484 = vmatprep.subr.mxu0 0.0
  %485 = vmatpush1.msra.mxu0 0.0
  %486 = vmatprep.subr.mxu0 0.0
  %487 = vmatpush1.msra.mxu0 0.0
  %488 = vmatprep.subr.mxu0 0.0
  %489 = vmatpush1.msra.mxu0 0.0
  %490 = vmatprep.subr.mxu0 0.0
  %491 = vmatpush1.msra.mxu0 0.0
  %492 = vmatprep.subr.mxu0 0.0
  %493 = vmatpush1.msra.mxu0 0.0
  %494 = vmatprep.subr.mxu0 0.0
  %495 = vmatpush1.msra.mxu0 0.0
  %496 = vmatprep.subr.mxu0 0.0
  %497 = vmatpush1.msra.mxu0 0.0
  %498 = vmatprep.subr.mxu0 0.0
  %499 = vmatpush1.msra.mxu0 0.0
  %500 = vmatprep.subr.mxu0 0.0
  %501 = vmatpush1.msra.mxu0 0.0
  %502 = vmatprep.subr.mxu0 0.0
  %503 = vmatpush1.msra.mxu0 0.0
  %504 = vmatprep.subr.mxu0 0.0
  %505 = vmatpush1.msra.mxu0 0.0
  %506 = vmatprep.mubr.f32.mxu0 0.0
  %507 = vmatmul.mubr.f32.gmra.mrb[0].mxu0 %v435
  %v508 = vpop.f32.mrb[0].mxu0
  %v509 = vadd.f32 0.0, %v508
  %v510 = vpop.f32.mrb[0].mxu0
  %511 = vmatprep.mubr.f32.mxu0 0.0
  %512 = vmatmul.mubr.f32.gmra.mrb[0].mxu0 %v438
  %v513 = vpop.f32.mrb[0].mxu0
  %v514 = vadd.f32 0.0, %v513
  %v515 = vpop.f32.mrb[0].mxu0
  %516 = vdwg.mxu0
  %v518 = vrot.slane %v204, 2
  %v519 = vsel %vm328, %v518, 0
  %521 = vmatprep.subr.mxu0 0.0
  %522 = vmatpush1.msra.mxu0 %v509
  %523 = vmatprep.subr.mxu0 0.0
  %524 = vmatpush1.msra.mxu0 %v514
  %525 = vmatprep.subr.mxu0 0.0
  %526 = vmatpush1.msra.mxu0 0.0
  %527 = vmatprep.subr.mxu0 0.0
  %528 = vmatpush1.msra.mxu0 0.0
  %529 = vmatprep.subr.mxu0 0.0
  %530 = vmatpush1.msra.mxu0 0.0
  %531 = vmatprep.subr.mxu0 0.0
  %532 = vmatpush1.msra.mxu0 0.0
  %533 = vmatprep.subr.mxu0 0.0
  %534 = vmatpush1.msra.mxu0 0.0
  %535 = vmatprep.subr.mxu0 0.0
  %536 = vmatpush1.msra.mxu0 0.0
  %537 = vmatprep.subr.mxu0 0.0
  %538 = vmatpush1.msra.mxu0 0.0
  %539 = vmatprep.subr.mxu0 0.0
  %540 = vmatpush1.msra.mxu0 0.0
  %541 = vmatprep.subr.mxu0 0.0
  %542 = vmatpush1.msra.mxu0 0.0
  %543 = vmatprep.subr.mxu0 0.0
  %544 = vmatpush1.msra.mxu0 0.0
  %545 = vmatprep.subr.mxu0 0.0
  %546 = vmatpush1.msra.mxu0 0.0
  %547 = vmatprep.subr.mxu0 0.0
  %548 = vmatpush1.msra.mxu0 0.0
  %549 = vmatprep.subr.mxu0 0.0
  %550 = vmatpush1.msra.mxu0 0.0
  %551 = vmatprep.subr.mxu0 0.0
  %552 = vmatpush1.msra.mxu0 0.0
  %553 = vmatprep.subr.mxu0 0.0
  %554 = vmatpush1.msra.mxu0 0.0
  %555 = vmatprep.subr.mxu0 0.0
  %556 = vmatpush1.msra.mxu0 0.0
  %557 = vmatprep.subr.mxu0 0.0
  %558 = vmatpush1.msra.mxu0 0.0
  %559 = vmatprep.subr.mxu0 0.0
  %560 = vmatpush1.msra.mxu0 0.0
  %561 = vmatprep.subr.mxu0 0.0
  %562 = vmatpush1.msra.mxu0 0.0
  %563 = vmatprep.subr.mxu0 0.0
  %564 = vmatpush1.msra.mxu0 0.0
  %565 = vmatprep.subr.mxu0 0.0
  %566 = vmatpush1.msra.mxu0 0.0
  %567 = vmatprep.subr.mxu0 0.0
  %568 = vmatpush1.msra.mxu0 0.0
  %569 = vmatprep.subr.mxu0 0.0
  %570 = vmatpush1.msra.mxu0 0.0
  %571 = vmatprep.subr.mxu0 0.0
  %572 = vmatpush1.msra.mxu0 0.0
  %573 = vmatprep.subr.mxu0 0.0
  %574 = vmatpush1.msra.mxu0 0.0
  %575 = vmatprep.subr.mxu0 0.0
  %576 = vmatpush1.msra.mxu0 0.0
  %577 = vmatprep.subr.mxu0 0.0
  %578 = vmatpush1.msra.mxu0 0.0
  %579 = vmatprep.subr.mxu0 0.0
  %580 = vmatpush1.msra.mxu0 0.0
  %581 = vmatprep.subr.mxu0 0.0
  %582 = vmatpush1.msra.mxu0 0.0
  %583 = vmatprep.subr.mxu0 0.0
  %584 = vmatpush1.msra.mxu0 0.0
  %585 = vmatprep.mubr.f32.mxu0 0.0
  %586 = vmatmul.mubr.f32.gmra.mrb[0].mxu0 %v519
  %v587 = vpop.f32.mrb[0].mxu0
  %v588 = vadd.f32 0.0, %v587
  %v589 = vpop.f32.mrb[0].mxu0
  %590 = vdwg.mxu0
  %v592 = vrot.slane %v588, 6
  %v594 = vsel %vm249, %v398, %v592
  %v596 = vsel %vm328, %v594, 0
  %598 = vmatprep.subr.mxu0 0.0
  %599 = vmatpush1.msra.mxu0 %v35
  %600 = vmatprep.subr.mxu0 0.0
  %601 = vmatpush1.msra.mxu0 %v36
  %602 = vmatprep.subr.mxu0 0.0
  %603 = vmatpush1.msra.mxu0 0.0
  %604 = vmatprep.subr.mxu0 0.0
  %605 = vmatpush1.msra.mxu0 0.0
  %606 = vmatprep.subr.mxu0 0.0
  %607 = vmatpush1.msra.mxu0 0.0
  %608 = vmatprep.subr.mxu0 0.0
  %609 = vmatpush1.msra.mxu0 0.0
  %610 = vmatprep.subr.mxu0 0.0
  %611 = vmatpush1.msra.mxu0 0.0
  %612 = vmatprep.subr.mxu0 0.0
  %613 = vmatpush1.msra.mxu0 0.0
  %614 = vmatprep.subr.mxu0 0.0
  %615 = vmatpush1.msra.mxu0 0.0
  %616 = vmatprep.subr.mxu0 0.0
  %617 = vmatpush1.msra.mxu0 0.0
  %618 = vmatprep.subr.mxu0 0.0
  %619 = vmatpush1.msra.mxu0 0.0
  %620 = vmatprep.subr.mxu0 0.0
  %621 = vmatpush1.msra.mxu0 0.0
  %622 = vmatprep.subr.mxu0 0.0
  %623 = vmatpush1.msra.mxu0 0.0
  %624 = vmatprep.subr.mxu0 0.0
  %625 = vmatpush1.msra.mxu0 0.0
  %626 = vmatprep.subr.mxu0 0.0
  %627 = vmatpush1.msra.mxu0 0.0
  %628 = vmatprep.subr.mxu0 0.0
  %629 = vmatpush1.msra.mxu0 0.0
  %630 = vmatprep.subr.mxu0 0.0
  %631 = vmatpush1.msra.mxu0 0.0
  %632 = vmatprep.subr.mxu0 0.0
  %633 = vmatpush1.msra.mxu0 0.0
  %634 = vmatprep.subr.mxu0 0.0
  %635 = vmatpush1.msra.mxu0 0.0
  %636 = vmatprep.subr.mxu0 0.0
  %637 = vmatpush1.msra.mxu0 0.0
  %638 = vmatprep.subr.mxu0 0.0
  %639 = vmatpush1.msra.mxu0 0.0
  %640 = vmatprep.subr.mxu0 0.0
  %641 = vmatpush1.msra.mxu0 0.0
  %642 = vmatprep.subr.mxu0 0.0
  %643 = vmatpush1.msra.mxu0 0.0
  %644 = vmatprep.subr.mxu0 0.0
  %645 = vmatpush1.msra.mxu0 0.0
  %646 = vmatprep.subr.mxu0 0.0
  %647 = vmatpush1.msra.mxu0 0.0
  %648 = vmatprep.subr.mxu0 0.0
  %649 = vmatpush1.msra.mxu0 0.0
  %650 = vmatprep.subr.mxu0 0.0
  %651 = vmatpush1.msra.mxu0 0.0
  %652 = vmatprep.subr.mxu0 0.0
  %653 = vmatpush1.msra.mxu0 0.0
  %654 = vmatprep.subr.mxu0 0.0
  %655 = vmatpush1.msra.mxu0 0.0
  %656 = vmatprep.subr.mxu0 0.0
  %657 = vmatpush1.msra.mxu0 0.0
  %658 = vmatprep.subr.mxu0 0.0
  %659 = vmatpush1.msra.mxu0 0.0
  %660 = vmatprep.subr.mxu0 0.0
  %661 = vmatpush1.msra.mxu0 0.0
  %662 = vmatprep.mubr.f32.mxu0 0.0
  %663 = vmatmul.mubr.f32.gmra.mrb[0].mxu0 %v596
  %v664 = vpop.f32.mrb[0].mxu0
  %v665 = vadd.f32 0.0, %v664
  %v666 = vpop.f32.mrb[0].mxu0
  %667 = vdwg.mxu0
  %v668 = vld [vmem:[%s5] sm:$0xff]
  %v669 = vld [vmem:[%s6] sm:$0xff]
  %671 = vset.pattern.permute.xlu0 0
  %672 = vperm.xlu0 %671, %v669
  %v673 = vpop.permute.xlu0 %672
  %vm675 = vcmask 31744
  %v677 = vsel %vm675, %v668, 0
  %vm679 = vcmask 1043456
  %v681 = vsel %vm679, %v665, 0
  %683 = vmatprep.subr.mxu0 0.0
  %684 = vmatpush1.msra.mxu0 %v681
  %685 = vmatprep.subr.mxu0 0.0
  %686 = vmatpush1.msra.mxu0 0.0
  %687 = vmatprep.subr.mxu0 0.0
  %688 = vmatpush1.msra.mxu0 0.0
  %689 = vmatprep.subr.mxu0 0.0
  %690 = vmatpush1.msra.mxu0 0.0
  %691 = vmatprep.subr.mxu0 0.0
  %692 = vmatpush1.msra.mxu0 0.0
  %693 = vmatprep.subr.mxu0 0.0
  %694 = vmatpush1.msra.mxu0 0.0
  %695 = vmatprep.subr.mxu0 0.0
  %696 = vmatpush1.msra.mxu0 0.0
  %697 = vmatprep.subr.mxu0 0.0
  %698 = vmatpush1.msra.mxu0 0.0
  %699 = vmatprep.subr.mxu0 0.0
  %700 = vmatpush1.msra.mxu0 0.0
  %701 = vmatprep.subr.mxu0 0.0
  %702 = vmatpush1.msra.mxu0 0.0
  %703 = vmatprep.subr.mxu0 0.0
  %704 = vmatpush1.msra.mxu0 0.0
  %705 = vmatprep.subr.mxu0 0.0
  %706 = vmatpush1.msra.mxu0 0.0
  %707 = vmatprep.subr.mxu0 0.0
  %708 = vmatpush1.msra.mxu0 0.0
  %709 = vmatprep.subr.mxu0 0.0
  %710 = vmatpush1.msra.mxu0 0.0
  %711 = vmatprep.subr.mxu0 0.0
  %712 = vmatpush1.msra.mxu0 0.0
  %713 = vmatprep.subr.mxu0 0.0
  %714 = vmatpush1.msra.mxu0 0.0
  %715 = vmatprep.subr.mxu0 0.0
  %716 = vmatpush1.msra.mxu0 0.0
  %717 = vmatprep.subr.mxu0 0.0
  %718 = vmatpush1.msra.mxu0 0.0
  %719 = vmatprep.subr.mxu0 0.0
  %720 = vmatpush1.msra.mxu0 0.0
  %721 = vmatprep.subr.mxu0 0.0
  %722 = vmatpush1.msra.mxu0 0.0
  %723 = vmatprep.subr.mxu0 0.0
  %724 = vmatpush1.msra.mxu0 0.0
  %725 = vmatprep.subr.mxu0 0.0
  %726 = vmatpush1.msra.mxu0 0.0
  %727 = vmatprep.subr.mxu0 0.0
  %728 = vmatpush1.msra.mxu0 0.0
  %729 = vmatprep.subr.mxu0 0.0
  %730 = vmatpush1.msra.mxu0 0.0
  %731 = vmatprep.subr.mxu0 0.0
  %732 = vmatpush1.msra.mxu0 0.0
  %733 = vmatprep.subr.mxu0 0.0
  %734 = vmatpush1.msra.mxu0 0.0
  %735 = vmatprep.subr.mxu0 0.0
  %736 = vmatpush1.msra.mxu0 0.0
  %737 = vmatprep.subr.mxu0 0.0
  %738 = vmatpush1.msra.mxu0 0.0
  %739 = vmatprep.subr.mxu0 0.0
  %740 = vmatpush1.msra.mxu0 0.0
  %741 = vmatprep.subr.mxu0 0.0
  %742 = vmatpush1.msra.mxu0 0.0
  %743 = vmatprep.subr.mxu0 0.0
  %744 = vmatpush1.msra.mxu0 0.0
  %745 = vmatprep.subr.mxu0 0.0
  %746 = vmatpush1.msra.mxu0 0.0
  %747 = vmatprep.mubr.f32.mxu0 0.0
  %748 = vmatmul.mubr.f32.gmra.mrb[0].mxu0 %v677
  %v749 = vpop.f32.mrb[0].mxu0
  %v750 = vadd.f32 %v673, %v749
  %v751 = vpop.f32.mrb[0].mxu0
  %752 = vdwg.mxu0
  %v753 = vadd.f32 %v26, %v750
  %754 = vst.msk [vmem:[%s7] sm:$0xff] %vm37, %v753
  // Predicated region
  $region30: #{fre_nonlocal_pallas.1} parent=0 // pred_check
    _
  $region31: #{fre_nonlocal_pallas.1} parent=0 // pred_check_branch
    %756 = sbr.rel (0) target = $region33
  $region32: #{fre_nonlocal_pallas.1} parent=0 // pred_region
    _
  $region33: #{fre_nonlocal_pallas.1} parent=0 // pred_fallthru
    _
  // Predicated region
  $region34: #{fre_nonlocal_pallas.1} parent=0 // pred_check
    _
  $region35: #{fre_nonlocal_pallas.1} parent=0 // pred_check_branch
    %758 = sbr.rel (0) target = $region37
  $region36: #{fre_nonlocal_pallas.1} parent=0 // pred_region
    _
  $region37: #{fre_nonlocal_pallas.1} parent=0 // pred_fallthru
    _

</llo_original>
